<compile_context>
chip_gen: v7x
topology: tpu7x:2x2x1
jax: 0.10.0
libtpu: 0.0.40
codegen_flags: <defaults>
</compile_context>

<pallas_src>
import jax
import jax.numpy as jnp
from jax import lax
from jax.experimental import pallas as pl
from jax.experimental.pallas import tpu as pltpu

HIDDEN = 256
MAX_TM = 1024   # rows per grid step for large batches


def _round_up(x, m):
  return ((x + m - 1) // m) * m


def _bucket_batch(b):
  """Pad the batch to a small fixed set of sizes (avoids per-B recompiles)."""
  if b <= 8:
    return 8
  if b <= MAX_TM:
    return 1 << (b - 1).bit_length()        # next power of two
  return _round_up(b, MAX_TM)


def _choose_tm(padded_b):
  """Batch-tile rows: exactly divides padded_b; multiple of 128 when tiled."""
  if padded_b <= 128:
    return padded_b                          # single full-extent block
  if padded_b <= 2 * MAX_TM:
    return max(padded_b // 2, 128)           # >= 2 grid steps (v7x megacore)
  return MAX_TM


def _value_net_kernel(x_ref, w1_ref, b1_ref, w2_ref, b2_ref, w3_ref, b3_ref,
                      o_ref):
  """One batch tile: o[out_dim, tm] = fc3(relu(fc2(relu(fc1(x[tm, in])))))^T."""
  x = x_ref[...].astype(jnp.bfloat16)                              # (tm, in)
  h1 = jnp.dot(x, w1_ref[...],
               preferred_element_type=jnp.float32) + b1_ref[...]
  h1 = jnp.maximum(h1, 0.0)                                        # (tm, 256)
  h2 = jnp.dot(h1.astype(jnp.bfloat16), w2_ref[...],
               preferred_element_type=jnp.float32) + b2_ref[...]
  h2 = jnp.maximum(h2, 0.0)                                        # (tm, 256)
  # Value head with batch on lanes: contract HIDDEN of w3 (out_dim, H) with
  # HIDDEN of h2 (tm, H) -> (out_dim, tm). Lane-dense store, out_dim*4 B/row.
  head = lax.dot_general(w3_ref[...], h2.astype(jnp.bfloat16),
                         dimension_numbers=(((1,), (1,)), ((), ())),
                         preferred_element_type=jnp.float32)
  o_ref[...] = head + b3_ref[...]


def prepare_params(params):
  """One-time conversion of raw (fan_in, fan_out) params into kernel form."""
  out_dim = params["w3"].shape[1]
  kparams = dict(
      w1=params["w1"].astype(jnp.bfloat16),                 # (in_dim, 256)
      b1=params["b1"].reshape(1, -1).astype(jnp.float32),   # (1, 256)
      w2=params["w2"].astype(jnp.bfloat16),                 # (256, 256)
      b2=params["b2"].reshape(1, -1).astype(jnp.float32),   # (1, 256)
      w3=params["w3"].T.astype(jnp.bfloat16),               # (out_dim, 256)
      b3=params["b3"].reshape(-1, 1).astype(jnp.float32),   # (out_dim, 1)
  )
  return kparams, out_dim


@jax.jit
def _forward_padded(state_padded, kparams):
  """Bucketed-batch forward: (pb, in_dim) f32 -> (out_dim, pb) f32."""
  pb, in_dim = state_padded.shape
  out_dim = kparams["w3"].shape[0]
  tm = _choose_tm(pb)
  grid = (pb // tm,)                      # exact: no ragged tiles by design

  # Weights/biases: constant index_map (resident in VMEM, DMA'd once) and
  # single-buffered so no pipeline slots / VMEM go to blocks that never change.
  resident = dict(index_map=lambda i: (0, 0),
                  pipeline_mode=pl.Buffered(buffer_count=1))

  flops = 2 * pb * (in_dim * HIDDEN + HIDDEN * HIDDEN + HIDDEN * out_dim)
  bytes_accessed = (
      pb * in_dim * 4 + pb * out_dim * 4          # streamed x in / out (f32)
      + in_dim * HIDDEN * 2 + HIDDEN * 4          # w1 (bf16) / b1 (f32)
      + HIDDEN * HIDDEN * 2 + HIDDEN * 4          # w2 (bf16) / b2 (f32)
      + out_dim * HIDDEN * 2 + out_dim * 4)       # w3 (bf16) / b3 (f32)

  return pl.pallas_call(
      _value_net_kernel,
      grid=grid,
      in_specs=[
          pl.BlockSpec((tm, in_dim), lambda i: (i, 0)),     # streamed x tile
          pl.BlockSpec((in_dim, HIDDEN), **resident),       # w1
          pl.BlockSpec((1, HIDDEN), **resident),            # b1
          pl.BlockSpec((HIDDEN, HIDDEN), **resident),       # w2
          pl.BlockSpec((1, HIDDEN), **resident),            # b2
          pl.BlockSpec((out_dim, HIDDEN), **resident),      # w3 (head rows)
          pl.BlockSpec((out_dim, 1), **resident),           # b3
      ],
      out_specs=pl.BlockSpec((out_dim, tm), lambda i: (0, i)),
      out_shape=jax.ShapeDtypeStruct((out_dim, pb), jnp.float32),
      compiler_params=pltpu.CompilerParams(
          dimension_semantics=("parallel",)),
      cost_estimate=pl.CostEstimate(
          flops=flops, transcendentals=0, bytes_accessed=bytes_accessed),
  )(state_padded, kparams["w1"], kparams["b1"], kparams["w2"], kparams["b2"],
    kparams["w3"], kparams["b3"])


def value_network_forward(state, kparams):
  """ValueNetwork forward: state (B, input_dim) -> (B, out_dim) f32."""
  b = state.shape[0]
  pb = _bucket_batch(b)
  x = state.astype(jnp.float32)
  if pb != b:
    x = jnp.pad(x, ((0, pb - b), (0, 0)))   # tiny: 12 B/row, few buckets only
  out_t = _forward_padded(x, kparams)       # (out_dim, pb), lane-dense
  return out_t[:, :b].T                     # (b, out_dim); cheap for out_dim=1


def init_value_network_params(key, input_dim, output_dim, init_w=0.003):
  """Mirror nn.Linear defaults + the fc3 uniform(-init_w, init_w) override.

  Weights stored as (fan_in, fan_out) (transposed vs PyTorch) so the math is
  plain x @ W + b; prepare_params re-lays-out the head for the kernel.
  """
  k1, k2, k3, k4, k5, k6 = jax.random.split(key, 6)

  def linear_init(kw, kb, fan_in, fan_out):
    bound = 1.0 / jnp.sqrt(jnp.float32(fan_in))
    w = jax.random.uniform(kw, (fan_in, fan_out), jnp.float32, -bound, bound)
    bvec = jax.random.uniform(kb, (fan_out,), jnp.float32, -bound, bound)
    return w, bvec

  w1, b1 = linear_init(k1, k2, input_dim, HIDDEN)
  w2, b2 = linear_init(k3, k4, HIDDEN, HIDDEN)
  w3 = jax.random.uniform(k5, (HIDDEN, output_dim), jnp.float32, -init_w, init_w)
  b3 = jax.random.uniform(k6, (output_dim,), jnp.float32, -init_w, init_w)
  return dict(w1=w1, b1=b1, w2=w2, b2=b2, w3=w3, b3=b3)


def _reference_forward(state, raw):
  """Pure-JAX reference with the same bf16 / f32-accumulation policy."""
  x = state.astype(jnp.bfloat16)
  h1 = jnp.maximum(
      jnp.dot(x, raw["w1"].astype(jnp.bfloat16),
              preferred_element_type=jnp.float32) + raw["b1"], 0.0)
  h2 = jnp.maximum(
      jnp.dot(h1.astype(jnp.bfloat16), raw["w2"].astype(jnp.bfloat16),
              preferred_element_type=jnp.float32) + raw["b2"], 0.0)
  return jnp.dot(h2.astype(jnp.bfloat16), raw["w3"].astype(jnp.bfloat16),
                 preferred_element_type=jnp.float32) + raw["b3"]


if __name__ == "__main__":
  key = jax.random.PRNGKey(0)
  k_params, k_state, k_state2 = jax.random.split(key, 3)

  # Pendulum-v0: state dim 3; value head output dim 1.
  batch, input_dim, output_dim = 2, 3, 1
  raw = init_value_network_params(k_params, input_dim, output_dim)
  kparams, out_dim = prepare_params(raw)

  # Small-batch path: bucketed to 8 rows, single full-extent block, grid=(1,).
  state = jax.random.normal(k_state, (batch, input_dim), jnp.float32)
  out = jax.block_until_ready(value_network_forward(state, kparams))
  ref = _reference_forward(state, raw)
  assert out.shape == (batch, output_dim), out.shape
  assert jnp.allclose(out, ref, atol=1e-3, rtol=1e-3), (out, ref)

  # Tiled path: 500 rows -> bucket 512, tm=256, grid=(2,) (both v7x TCs busy).
  big = jax.random.normal(k_state2, (500, input_dim), jnp.float32)
  out_big = jax.block_until_ready(value_network_forward(big, kparams))
  ref_big = _reference_forward(big, raw)
  assert out_big.shape == (500, output_dim), out_big.shape
  assert jnp.allclose(out_big, ref_big, atol=1e-3, rtol=1e-3), float(
      jnp.max(jnp.abs(out_big - ref_big)))

  print("KERNEL_OK")
</pallas_src>

<mosaic_0001>
module attributes {stable_mosaic.version = 11 : i64} {
  func.func @_value_net_kernel(%arg0: i32, %arg1: memref<8x3xf32, #tpu.memory_space<vmem>>, %arg2: memref<3x256xbf16, #tpu.memory_space<vmem>>, %arg3: memref<1x256xf32, #tpu.memory_space<vmem>>, %arg4: memref<256x256xbf16, #tpu.memory_space<vmem>>, %arg5: memref<1x256xf32, #tpu.memory_space<vmem>>, %arg6: memref<1x256xbf16, #tpu.memory_space<vmem>>, %arg7: memref<1x1xf32, #tpu.memory_space<vmem>>, %arg8: memref<1x8xf32, #tpu.memory_space<vmem>>) attributes {dimension_semantics = [#tpu.dimension_semantics<parallel>], iteration_bounds = array<i64: 1>, scalar_prefetch = 0 : i64, scratch_operands = 0 : i64, tpu.core_type = #tpu.core_type<tc>, window_params = [{transform_indices = @transform_0, window_bounds = array<i64: 8, 3>}, {pipeline_mode = #tpu.pipeline_mode<synchronous>, transform_indices = @transform_1, window_bounds = array<i64: 3, 256>}, {pipeline_mode = #tpu.pipeline_mode<synchronous>, transform_indices = @transform_2, window_bounds = array<i64: 1, 256>}, {pipeline_mode = #tpu.pipeline_mode<synchronous>, transform_indices = @transform_3, window_bounds = array<i64: 256, 256>}, {pipeline_mode = #tpu.pipeline_mode<synchronous>, transform_indices = @transform_4, window_bounds = array<i64: 1, 256>}, {pipeline_mode = #tpu.pipeline_mode<synchronous>, transform_indices = @transform_5, window_bounds = array<i64: 1, 256>}, {pipeline_mode = #tpu.pipeline_mode<synchronous>, transform_indices = @transform_6, window_bounds = array<i64: 1, 1>}, {transform_indices = @transform_7, window_bounds = array<i64: 1, 8>}]} {
    %c0 = arith.constant 0 : index
    %c0_0 = arith.constant 0 : index
    %0 = vector.load %arg1[%c0, %c0_0] : memref<8x3xf32, #tpu.memory_space<vmem>>, vector<8x3xf32>
    %1 = arith.truncf %0 : vector<8x3xf32> to vector<8x3xbf16>
    %c0_1 = arith.constant 0 : index
    %c0_2 = arith.constant 0 : index
    %2 = vector.load %arg2[%c0_1, %c0_2] : memref<3x256xbf16, #tpu.memory_space<vmem>>, vector<3x256xbf16>
    %cst = arith.constant dense<0.000000e+00> : vector<8x256xf32>
    %3 = tpu.matmul %1, %2, %cst {dimension_numbers = #tpu.dot_dimension_numbers<[1], [0], [0], [1], [0, 0, 1, 1], [], []>} : vector<8x3xbf16>, vector<3x256xbf16>, vector<8x256xf32> -> vector<8x256xf32>
    %c0_3 = arith.constant 0 : index
    %c0_4 = arith.constant 0 : index
    %4 = vector.load %arg3[%c0_3, %c0_4] : memref<1x256xf32, #tpu.memory_space<vmem>>, vector<1x256xf32>
    %5 = vector.broadcast %4 : vector<1x256xf32> to vector<8x256xf32>
    %6 = arith.addf %3, %5 : vector<8x256xf32>
    %cst_5 = arith.constant 0.000000e+00 : f32
    %7 = vector.broadcast %cst_5 : f32 to vector<8x256xf32>
    %8 = arith.maximumf %6, %7 : vector<8x256xf32>
    %9 = arith.truncf %8 : vector<8x256xf32> to vector<8x256xbf16>
    %c0_6 = arith.constant 0 : index
    %c0_7 = arith.constant 0 : index
    %10 = vector.load %arg4[%c0_6, %c0_7] : memref<256x256xbf16, #tpu.memory_space<vmem>>, vector<256x256xbf16>
    %cst_8 = arith.constant dense<0.000000e+00> : vector<8x256xf32>
    %11 = tpu.matmul %9, %10, %cst_8 {dimension_numbers = #tpu.dot_dimension_numbers<[1], [0], [0], [1], [0, 0, 1, 1], [], []>} : vector<8x256xbf16>, vector<256x256xbf16>, vector<8x256xf32> -> vector<8x256xf32>
    %c0_9 = arith.constant 0 : index
    %c0_10 = arith.constant 0 : index
    %12 = vector.load %arg5[%c0_9, %c0_10] : memref<1x256xf32, #tpu.memory_space<vmem>>, vector<1x256xf32>
    %13 = vector.broadcast %12 : vector<1x256xf32> to vector<8x256xf32>
    %14 = arith.addf %11, %13 : vector<8x256xf32>
    %cst_11 = arith.constant 0.000000e+00 : f32
    %15 = vector.broadcast %cst_11 : f32 to vector<8x256xf32>
    %16 = arith.maximumf %14, %15 : vector<8x256xf32>
    %c0_12 = arith.constant 0 : index
    %c0_13 = arith.constant 0 : index
    %17 = vector.load %arg6[%c0_12, %c0_13] : memref<1x256xbf16, #tpu.memory_space<vmem>>, vector<1x256xbf16>
    %18 = arith.truncf %16 : vector<8x256xf32> to vector<8x256xbf16>
    %cst_14 = arith.constant dense<0.000000e+00> : vector<1x8xf32>
    %19 = tpu.matmul %17, %18, %cst_14 {dimension_numbers = #tpu.dot_dimension_numbers<[1], [1], [0], [0], [0, 0, 1, 0], [], []>} : vector<1x256xbf16>, vector<8x256xbf16>, vector<1x8xf32> -> vector<1x8xf32>
    %c0_15 = arith.constant 0 : index
    %c0_16 = arith.constant 0 : index
    %20 = vector.load %arg7[%c0_15, %c0_16] : memref<1x1xf32, #tpu.memory_space<vmem>>, vector<1x1xf32>
    %21 = vector.broadcast %20 : vector<1x1xf32> to vector<1x8xf32>
    %22 = arith.addf %19, %21 : vector<1x8xf32>
    %c0_17 = arith.constant 0 : index
    %c0_18 = arith.constant 0 : index
    %23 = vector.load %arg8[%c0_17, %c0_18] : memref<1x8xf32, #tpu.memory_space<vmem>>, vector<1x8xf32>
    tpu.vector_store %arg8[%c0_17, %c0_18], %22 {strides = array<i32>} : memref<1x8xf32, #tpu.memory_space<vmem>>, vector<1x8xf32>,
    return
  }
  func.func @transform_0(%arg0: i32) -> (i32, i32) {
    %c0_i32 = arith.constant 0 : i32
    %c0_i32_0 = arith.constant 0 : i32
    return %arg0, %c0_i32 : i32, i32
  }
  func.func @transform_1(%arg0: i32) -> (i32, i32) {
    %c0_i32 = arith.constant 0 : i32
    %c0_i32_0 = arith.constant 0 : i32
    %c0_i32_1 = arith.constant 0 : i32
    return %c0_i32, %c0_i32_0 : i32, i32
  }
  func.func @transform_2(%arg0: i32) -> (i32, i32) {
    %c0_i32 = arith.constant 0 : i32
    %c0_i32_0 = arith.constant 0 : i32
    %c0_i32_1 = arith.constant 0 : i32
    return %c0_i32, %c0_i32_0 : i32, i32
  }
  func.func @transform_3(%arg0: i32) -> (i32, i32) {
    %c0_i32 = arith.constant 0 : i32
    %c0_i32_0 = arith.constant 0 : i32
    %c0_i32_1 = arith.constant 0 : i32
    return %c0_i32, %c0_i32_0 : i32, i32
  }
  func.func @transform_4(%arg0: i32) -> (i32, i32) {
    %c0_i32 = arith.constant 0 : i32
    %c0_i32_0 = arith.constant 0 : i32
    %c0_i32_1 = arith.constant 0 : i32
    return %c0_i32, %c0_i32_0 : i32, i32
  }
  func.func @transform_5(%arg0: i32) -> (i32, i32) {
    %c0_i32 = arith.constant 0 : i32
    %c0_i32_0 = arith.constant 0 : i32
    %c0_i32_1 = arith.constant 0 : i32
    return %c0_i32, %c0_i32_0 : i32, i32
  }
  func.func @transform_6(%arg0: i32) -> (i32, i32) {
    %c0_i32 = arith.constant 0 : i32
    %c0_i32_0 = arith.constant 0 : i32
    %c0_i32_1 = arith.constant 0 : i32
    return %c0_i32, %c0_i32_0 : i32, i32
  }
  func.func @transform_7(%arg0: i32) -> (i32, i32) {
    %c0_i32 = arith.constant 0 : i32
    %c0_i32_0 = arith.constant 0 : i32
    return %c0_i32, %arg0 : i32, i32
  }
}

</mosaic_0001>

<llo_original>
// kernel: _forward_padded.1
$region0: #{_forward_padded.1}
  #allocation0 [shape = 'u32[]', space=smem, size = 0x4, offset = 0x4, fixed_abs, tag = 'smem constant byte address 0x4 - core index']
  #allocation1 [shape = 'u32[144,128]{1,0:T(1,128)}', space=vmem, size = 0x12000, scoped, tag = 'internal scratch']
  #allocation2 [shape = 'f32[1,1]{1,0:T(1,128)S(1)}', space=vmem, size = 0x200, scoped, tag = 'scoped memory for _forward_padded.1']
  %s0 = inlined_call_operand.vmem [shape: f32[8,3], index: 0, kind: input, shape index: {}]
  %s1 = inlined_call_operand.vmem [shape: bf16[3,256], index: 1, kind: input, shape index: {}]
  %s2 = inlined_call_operand.vmem [shape: f32[1,256], index: 2, kind: input, shape index: {}]
  %s3 = inlined_call_operand.hbm [shape: bf16[256,256], index: 3, kind: input, shape index: {}]
  %s4 = inlined_call_operand.vmem [shape: f32[1,256], index: 4, kind: input, shape index: {}]
  %s5 = inlined_call_operand.vmem [shape: bf16[1,256], index: 5, kind: input, shape index: {}]
  %s6 = inlined_call_operand.<no memory space> [shape: f32[1,1], index: 6, kind: input, shape index: {}]
  %s7 = inlined_call_operand.hbm [shape: f32[1,8], index: 7, kind: output, shape index: {}]
  %s8 = sld [smem:[#allocation0]]
  $region42: #{_forward_padded.1} parent=0
    _
  %s10 = ssub.s32 1, %s8
  %s11 = scalar_select 0, %s10, %s8
  %v12 = vstv %s6
  %13 = vst [vmem:[#allocation2] sm:$0x1] %v12
  $region1: #{_forward_padded.1} parent=0
    #allocation3 [shape = 'u8[131072]{0}', space=vmem, size = 0x20000, scoped, tag = 'input window, operand 3, single buffered']
    #allocation4 [shape = 's32[1]{0}', space=sflag, size = 0x4, scoped, tag = 'scoped memory for _forward_padded.1']
    #allocation5 [shape = 's32[1]{0}', space=sflag, size = 0x4, scoped, tag = 'scoped memory for _forward_padded.1']
    #allocation6 [shape = 'u8[512]{0}', space=vmem, size = 0x400, scoped, tag = 'output window, operand 0, single buffered']
    %14 = vsyncpa [#allocation4], 0
    %15 = vsyncpa [#allocation5], 0
    // Predicated region
    $region2: #{_forward_padded.1} parent=1 // pred_check
      _
    $region3: #{_forward_padded.1} parent=1 // pred_check_branch
      %17 = sbr.rel (0) target = $region5
    $region4: #{_forward_padded.1} parent=1 // pred_region
      _
    $region5: #{_forward_padded.1} parent=1 // pred_fallthru
      _
    // Predicated region
    $region6: #{_forward_padded.1} parent=1 // pred_check
      _
    $region7: #{_forward_padded.1} parent=1 // pred_check_branch
      %19 = sbr.rel (0) target = $region9
    $region8: #{_forward_padded.1} parent=1 // pred_region
      _
    $region9: #{_forward_padded.1} parent=1 // pred_fallthru
      _
    // Predicated region
    $region10: #{_forward_padded.1} parent=1 // pred_check
      _
    $region11: #{_forward_padded.1} parent=1 // pred_check_branch
      %21 = sbr.rel (0) target = $region13
    $region12: #{_forward_padded.1} parent=1 // pred_region
      _
    $region13: #{_forward_padded.1} parent=1 // pred_fallthru
      _
    // Predicated region
    $region14: #{_forward_padded.1} parent=1 // pred_check
      _
    $region15: #{_forward_padded.1} parent=1 // pred_check_branch
      %23 = sbr.rel (0) target = $region17
    $region16: #{_forward_padded.1} parent=1 // pred_region
      %s25 = ssub.s32 4096, 4096
      %26 = vsyncadd [#allocation4], %s25
      %s27 = sshll.u32 [#allocation3], 4
      %s28 = int_to_ptr.vmem [resolvable:$true] %s27
      %33 = dma.hbm_to_vmem [thread:$0]  %s3, 4096, %s28, [#allocation4], 128, 128, 8
    $region17: #{_forward_padded.1} parent=1 // pred_fallthru
      _
    // Predicated region
    $region18: #{_forward_padded.1} parent=1 // pred_check
      _
    $region19: #{_forward_padded.1} parent=1 // pred_check_branch
      %35 = sbr.rel (0) target = $region21
    $region20: #{_forward_padded.1} parent=1 // pred_region
      _
    $region21: #{_forward_padded.1} parent=1 // pred_fallthru
      _
    // Predicated region
    $region22: #{_forward_padded.1} parent=1 // pred_check
      _
    $region23: #{_forward_padded.1} parent=1 // pred_check_branch
      %37 = sbr.rel (0) target = $region25
    $region24: #{_forward_padded.1} parent=1 // pred_region
      _
    $region25: #{_forward_padded.1} parent=1 // pred_fallthru
      _
    // Predicated region
    $region26: #{_forward_padded.1} parent=1 // pred_check
      _
    $region27: #{_forward_padded.1} parent=1 // pred_check_branch
      %39 = sbr.rel (0) target = $region29
    $region28: #{_forward_padded.1} parent=1 // pred_region
      _
    $region29: #{_forward_padded.1} parent=1 // pred_fallthru
      _
    // Predicated region
    $region30: #{_forward_padded.1} parent=1 // pred_check
      _
    $region31: #{_forward_padded.1} parent=1 // pred_check_branch
      %41 = sbr.rel (0) target = $region33
    $region32: #{_forward_padded.1} parent=1 // pred_region
      %42 = dma.done [#allocation4], 4096
    $region33: #{_forward_padded.1} parent=1 // pred_fallthru
      _
    %v44 = vld [vmem:[%s0] sm:$0xff]
    %v45 = vpack.c.bf16 %v44, %v44
    %v46 = vld [vmem:[%s1] sm:$0xf]
    %v47 = vld [vmem:[%s2] sm:$0x3]
    %v49 = vlaneseq
    %v50 = vshrl.u32 %v49, 7
    %v51 = vsub.s32 0, %v50
    %v52 = vrot.slane %v47, %v51
    %v53 = vlaneseq
    %v54 = vshrl.u32 %v53, 7
    %v55 = vsub.s32 1, %v54
    %v56 = vrot.slane %v47, %v55
    %v61 = vunpack.c.l.s4 1983009808
    %v62 = vunpack.c.0.s8 %v61
    %v63 = vlaneseq
    %v64 = vshrl.u32 %v63, 7
    %v65 = vsub.s32 %v62, %v64
    %v66 = vrot.slane %v46, %v65
    %v67 = vcombine.high %v66, %v66
    %vm68 = vcmask 23552
    %v70 = vsel %vm68, %v45, 0
    %vm72 = vcmask 1040384
    %vm73 = vcmask 1041408
    %v74 = vsel %vm72, 4294967295, 65535
    %v75 = vsel %vm73, %v74, 0
    %v77 = vand.u32 %v66, %v75
    %v80 = vand.u32 %v67, %v75
    %82 = vmatprep.subr.bf16.mxu0 %v80
    %83 = vmatpush1.bf16.msra.mxu0 %v77
    %84 = vmatprep.subr.bf16.mxu0 0
    %85 = vmatpush1.bf16.msra.mxu0 0
    %86 = vmatprep.subr.bf16.mxu0 0
    %87 = vmatpush1.bf16.msra.mxu0 0
    %88 = vmatprep.subr.bf16.mxu0 0
    %89 = vmatpush1.bf16.msra.mxu0 0
    %90 = vmatprep.subr.bf16.mxu0 0
    %91 = vmatpush1.bf16.msra.mxu0 0
    %92 = vmatprep.subr.bf16.mxu0 0
    %93 = vmatpush1.bf16.msra.mxu0 0
    %94 = vmatprep.subr.bf16.mxu0 0
    %95 = vmatpush1.bf16.msra.mxu0 0
    %96 = vmatprep.subr.bf16.mxu0 0
    %97 = vmatpush1.bf16.msra.mxu0 0
    %98 = vmatprep.subr.bf16.mxu0 0
    %99 = vmatpush1.bf16.msra.mxu0 0
    %100 = vmatprep.subr.bf16.mxu0 0
    %101 = vmatpush1.bf16.msra.mxu0 0
    %102 = vmatprep.subr.bf16.mxu0 0
    %103 = vmatpush1.bf16.msra.mxu0 0
    %104 = vmatprep.subr.bf16.mxu0 0
    %105 = vmatpush1.bf16.msra.mxu0 0
    %106 = vmatprep.subr.bf16.mxu0 0
    %107 = vmatpush1.bf16.msra.mxu0 0
    %108 = vmatprep.subr.bf16.mxu0 0
    %109 = vmatpush1.bf16.msra.mxu0 0
    %110 = vmatprep.subr.bf16.mxu0 0
    %111 = vmatpush1.bf16.msra.mxu0 0
    %112 = vmatprep.subr.bf16.mxu0 0
    %113 = vmatpush1.bf16.msra.mxu0 0
    %114 = vmatprep.mubr.bf16.mxu0 0
    %115 = vmatmul.mubr.bf16.gmra.mrb[0].mxu0 %v70
    %v116 = vpop.f32.mrb[0].mxu0
    %v117 = vadd.f32 %v52, %v116
    %v118 = vpop.f32.mrb[0].mxu0
    %v119 = vadd.f32 %v56, %v118
    %v120 = vpop.f32.mrb[0].mxu0
    %v121 = vpop.f32.mrb[0].mxu0
    %122 = vdwg.mxu0
    %v123 = vmax.f32 %v117, 0.0
    %v124 = vmax.f32 %v119, 0.0
    %v125 = vpack.c.bf16 %v123, %v123
    %v126 = vpack.c.bf16 %v124, %v124
    %v127 = vld [vmem:[#allocation3] sm:$0xff]
    %v128 = vld [vmem:[#allocation3 + $0x8] sm:$0xff]
    %v129 = vld [vmem:[#allocation3 + $0x10] sm:$0xff]
    %v130 = vld [vmem:[#allocation3 + $0x18] sm:$0xff]
    %v131 = vld [vmem:[#allocation3 + $0x20] sm:$0xff]
    %v132 = vld [vmem:[#allocation3 + $0x28] sm:$0xff]
    %v133 = vld [vmem:[#allocation3 + $0x30] sm:$0xff]
    %v134 = vld [vmem:[#allocation3 + $0x38] sm:$0xff]
    %v135 = vld [vmem:[#allocation3 + $0x40] sm:$0xff]
    %v136 = vld [vmem:[#allocation3 + $0x48] sm:$0xff]
    %v137 = vld [vmem:[#allocation3 + $0x50] sm:$0xff]
    %v138 = vld [vmem:[#allocation3 + $0x58] sm:$0xff]
    %v139 = vld [vmem:[#allocation3 + $0x60] sm:$0xff]
    %v140 = vld [vmem:[#allocation3 + $0x68] sm:$0xff]
    %v141 = vld [vmem:[#allocation3 + $0x70] sm:$0xff]
    %v142 = vld [vmem:[#allocation3 + $0x78] sm:$0xff]
    %v143 = vld [vmem:[#allocation3 + $0x80] sm:$0xff]
    %v144 = vld [vmem:[#allocation3 + $0x88] sm:$0xff]
    %v145 = vld [vmem:[#allocation3 + $0x90] sm:$0xff]
    %v146 = vld [vmem:[#allocation3 + $0x98] sm:$0xff]
    %v147 = vld [vmem:[#allocation3 + $0xa0] sm:$0xff]
    %v148 = vld [vmem:[#allocation3 + $0xa8] sm:$0xff]
    %v149 = vld [vmem:[#allocation3 + $0xb0] sm:$0xff]
    %v150 = vld [vmem:[#allocation3 + $0xb8] sm:$0xff]
    %v151 = vld [vmem:[#allocation3 + $0xc0] sm:$0xff]
    %v152 = vld [vmem:[#allocation3 + $0xc8] sm:$0xff]
    %v153 = vld [vmem:[#allocation3 + $0xd0] sm:$0xff]
    %v154 = vld [vmem:[#allocation3 + $0xd8] sm:$0xff]
    %v155 = vld [vmem:[#allocation3 + $0xe0] sm:$0xff]
    %v156 = vld [vmem:[#allocation3 + $0xe8] sm:$0xff]
    %v157 = vld [vmem:[#allocation3 + $0xf0] sm:$0xff]
    %v158 = vld [vmem:[#allocation3 + $0xf8] sm:$0xff]
    %v159 = vld [vmem:[%s4] sm:$0x3]
    %v161 = vlaneseq
    %v162 = vshrl.u32 %v161, 7
    %v163 = vsub.s32 0, %v162
    %v164 = vrot.slane %v159, %v163
    %v165 = vlaneseq
    %v166 = vshrl.u32 %v165, 7
    %v167 = vsub.s32 1, %v166
    %v168 = vrot.slane %v159, %v167
    %v203 = vunpack.c.l.b16 %v127
    %v204 = vunpack.c.h.b16 %v127
    %v205 = vunpack.c.l.b16 %v128
    %v206 = vunpack.c.h.b16 %v128
    %v207 = vunpack.c.l.b16 %v129
    %v208 = vunpack.c.h.b16 %v129
    %v209 = vunpack.c.l.b16 %v130
    %v210 = vunpack.c.h.b16 %v130
    %v211 = vunpack.c.l.b16 %v131
    %v212 = vunpack.c.h.b16 %v131
    %v213 = vunpack.c.l.b16 %v132
    %v214 = vunpack.c.h.b16 %v132
    %v215 = vunpack.c.l.b16 %v133
    %v216 = vunpack.c.h.b16 %v133
    %v217 = vunpack.c.l.b16 %v134
    %v218 = vunpack.c.h.b16 %v134
    %v219 = vunpack.c.l.b16 %v135
    %v220 = vunpack.c.h.b16 %v135
    %v221 = vunpack.c.l.b16 %v136
    %v222 = vunpack.c.h.b16 %v136
    %v223 = vunpack.c.l.b16 %v137
    %v224 = vunpack.c.h.b16 %v137
    %v225 = vunpack.c.l.b16 %v138
    %v226 = vunpack.c.h.b16 %v138
    %v227 = vunpack.c.l.b16 %v139
    %v228 = vunpack.c.h.b16 %v139
    %v229 = vunpack.c.l.b16 %v140
    %v230 = vunpack.c.h.b16 %v140
    %v231 = vunpack.c.l.b16 %v141
    %v232 = vunpack.c.h.b16 %v141
    %v233 = vunpack.c.l.b16 %v142
    %v234 = vunpack.c.h.b16 %v142
    %v235 = vunpack.c.l.b16 %v143
    %v236 = vunpack.c.h.b16 %v143
    %v237 = vunpack.c.l.b16 %v144
    %v238 = vunpack.c.h.b16 %v144
    %v239 = vunpack.c.l.b16 %v145
    %v240 = vunpack.c.h.b16 %v145
    %v241 = vunpack.c.l.b16 %v146
    %v242 = vunpack.c.h.b16 %v146
    %v243 = vunpack.c.l.b16 %v147
    %v244 = vunpack.c.h.b16 %v147
    %v245 = vunpack.c.l.b16 %v148
    %v246 = vunpack.c.h.b16 %v148
    %v247 = vunpack.c.l.b16 %v149
    %v248 = vunpack.c.h.b16 %v149
    %v249 = vunpack.c.l.b16 %v150
    %v250 = vunpack.c.h.b16 %v150
    %v251 = vunpack.c.l.b16 %v151
    %v252 = vunpack.c.h.b16 %v151
    %v253 = vunpack.c.l.b16 %v152
    %v254 = vunpack.c.h.b16 %v152
    %v255 = vunpack.c.l.b16 %v153
    %v256 = vunpack.c.h.b16 %v153
    %v257 = vunpack.c.l.b16 %v154
    %v258 = vunpack.c.h.b16 %v154
    %v259 = vunpack.c.l.b16 %v155
    %v260 = vunpack.c.h.b16 %v155
    %v261 = vunpack.c.l.b16 %v156
    %v262 = vunpack.c.h.b16 %v156
    %v263 = vunpack.c.l.b16 %v157
    %v264 = vunpack.c.h.b16 %v157
    %v265 = vunpack.c.l.b16 %v158
    %v266 = vunpack.c.h.b16 %v158
    %v267 = vpack.c.b16 %v205, %v203
    %v268 = vpack.c.b16 %v206, %v204
    %v269 = vpack.c.b16 %v209, %v207
    %v270 = vpack.c.b16 %v210, %v208
    %v271 = vpack.c.b16 %v213, %v211
    %v272 = vpack.c.b16 %v214, %v212
    %v273 = vpack.c.b16 %v217, %v215
    %v274 = vpack.c.b16 %v218, %v216
    %v275 = vpack.c.b16 %v221, %v219
    %v276 = vpack.c.b16 %v222, %v220
    %v277 = vpack.c.b16 %v225, %v223
    %v278 = vpack.c.b16 %v226, %v224
    %v279 = vpack.c.b16 %v229, %v227
    %v280 = vpack.c.b16 %v230, %v228
    %v281 = vpack.c.b16 %v233, %v231
    %v282 = vpack.c.b16 %v234, %v232
    %v283 = vpack.c.b16 %v237, %v235
    %v284 = vpack.c.b16 %v238, %v236
    %v285 = vpack.c.b16 %v241, %v239
    %v286 = vpack.c.b16 %v242, %v240
    %v287 = vpack.c.b16 %v245, %v243
    %v288 = vpack.c.b16 %v246, %v244
    %v289 = vpack.c.b16 %v249, %v247
    %v290 = vpack.c.b16 %v250, %v248
    %v291 = vpack.c.b16 %v253, %v251
    %v292 = vpack.c.b16 %v254, %v252
    %v293 = vpack.c.b16 %v257, %v255
    %v294 = vpack.c.b16 %v258, %v256
    %v295 = vpack.c.b16 %v261, %v259
    %v296 = vpack.c.b16 %v262, %v260
    %v297 = vpack.c.b16 %v265, %v263
    %v298 = vpack.c.b16 %v266, %v264
    %331 = vmatprep.subr.bf16.mxu0 %v268
    %332 = vmatpush1.bf16.msra.mxu0 %v267
    %333 = vmatprep.subr.bf16.mxu0 %v270
    %334 = vmatpush1.bf16.msra.mxu0 %v269
    %335 = vmatprep.subr.bf16.mxu0 %v272
    %336 = vmatpush1.bf16.msra.mxu0 %v271
    %337 = vmatprep.subr.bf16.mxu0 %v274
    %338 = vmatpush1.bf16.msra.mxu0 %v273
    %339 = vmatprep.subr.bf16.mxu0 %v276
    %340 = vmatpush1.bf16.msra.mxu0 %v275
    %341 = vmatprep.subr.bf16.mxu0 %v278
    %342 = vmatpush1.bf16.msra.mxu0 %v277
    %343 = vmatprep.subr.bf16.mxu0 %v280
    %344 = vmatpush1.bf16.msra.mxu0 %v279
    %345 = vmatprep.subr.bf16.mxu0 %v282
    %346 = vmatpush1.bf16.msra.mxu0 %v281
    %347 = vmatprep.subr.bf16.mxu0 %v284
    %348 = vmatpush1.bf16.msra.mxu0 %v283
    %349 = vmatprep.subr.bf16.mxu0 %v286
    %350 = vmatpush1.bf16.msra.mxu0 %v285
    %351 = vmatprep.subr.bf16.mxu0 %v288
    %352 = vmatpush1.bf16.msra.mxu0 %v287
    %353 = vmatprep.subr.bf16.mxu0 %v290
    %354 = vmatpush1.bf16.msra.mxu0 %v289
    %355 = vmatprep.subr.bf16.mxu0 %v292
    %356 = vmatpush1.bf16.msra.mxu0 %v291
    %357 = vmatprep.subr.bf16.mxu0 %v294
    %358 = vmatpush1.bf16.msra.mxu0 %v293
    %359 = vmatprep.subr.bf16.mxu0 %v296
    %360 = vmatpush1.bf16.msra.mxu0 %v295
    %361 = vmatprep.subr.bf16.mxu0 %v298
    %362 = vmatpush1.bf16.msra.mxu0 %v297
    %363 = vmatprep.mubr.bf16.mxu0 %v126
    %364 = vmatmul.mubr.bf16.gmra.mrb[0].mxu0 %v125
    %v365 = vpop.f32.mrb[0].mxu0
    %v366 = vadd.f32 %v164, %v365
    %v367 = vpop.f32.mrb[0].mxu0
    %v368 = vadd.f32 %v168, %v367
    %v369 = vpop.f32.mrb[0].mxu0
    %v370 = vpop.f32.mrb[0].mxu0
    %371 = vdwg.mxu0
    %v372 = vmax.f32 %v366, 0.0
    %v373 = vmax.f32 %v368, 0.0
    %v374 = vld [vmem:[%s5] sm:$0x3]
    %v375 = vpack.c.bf16 %v372, %v372
    %v376 = vpack.c.bf16 %v373, %v373
    %v377 = vld [vmem:[#allocation2] sm:$0x1]
    %379 = vset.pattern.permute.xlu0 0
    %380 = vperm.xlu0 %379, %v377
    %v381 = vpop.permute.xlu0 %380
    %v383 = vlaneseq
    %v384 = vshrl.u32 %v383, 7
    %v385 = vsub.s32 0, %v384
    %v386 = vrot.slane %v381, %v385
    %v389 = vunpack.c.l.s4 1966171168
    %v390 = vunpack.c.0.s8 %v389
    %v391 = vlaneseq
    %v392 = vshrl.u32 %v391, 7
    %v393 = vsub.s32 %v390, %v392
    %v394 = vrot.slane %v374, %v393
    %v395 = vcombine.high %v394, %v394
    %v397 = vunpack.c.l.s4 1966171168
    %v398 = vunpack.c.0.s8 %v397
    %v399 = vlaneseq
    %v400 = vshrl.u32 %v399, 7
    %v401 = vsub.s32 %v398, %v400
    %v402 = vrot.slane %v394, %v401
    %v404 = vunpack.c.l.s4 1966171168
    %v405 = vunpack.c.0.s8 %v404
    %v406 = vlaneseq
    %v407 = vshrl.u32 %v406, 7
    %v408 = vsub.s32 %v405, %v407
    %v409 = vrot.slane %v395, %v408
    %412 = vmatprep.subr.bf16.mxu0 %v376
    %413 = vmatpush1.bf16.xpose.msra.mxu0 %v375
    %414 = vmatprep.subr.bf16.mxu0 0
    %415 = vmatpush1.bf16.xpose.msra.mxu0 0
    %416 = vmatprep.subr.bf16.mxu0 0
    %417 = vmatpush1.bf16.xpose.msra.mxu0 0
    %418 = vmatprep.subr.bf16.mxu0 0
    %419 = vmatpush1.bf16.xpose.msra.mxu0 0
    %420 = vmatprep.subr.bf16.mxu0 0
    %421 = vmatpush1.bf16.xpose.msra.mxu0 0
    %422 = vmatprep.subr.bf16.mxu0 0
    %423 = vmatpush1.bf16.xpose.msra.mxu0 0
    %424 = vmatprep.subr.bf16.mxu0 0
    %425 = vmatpush1.bf16.xpose.msra.mxu0 0
    %426 = vmatprep.subr.bf16.mxu0 0
    %427 = vmatpush1.bf16.xpose.msra.mxu0 0
    %428 = vmatprep.subr.bf16.mxu0 0
    %429 = vmatpush1.bf16.xpose.msra.mxu0 0
    %430 = vmatprep.subr.bf16.mxu0 0
    %431 = vmatpush1.bf16.xpose.msra.mxu0 0
    %432 = vmatprep.subr.bf16.mxu0 0
    %433 = vmatpush1.bf16.xpose.msra.mxu0 0
    %434 = vmatprep.subr.bf16.mxu0 0
    %435 = vmatpush1.bf16.xpose.msra.mxu0 0
    %436 = vmatprep.subr.bf16.mxu0 0
    %437 = vmatpush1.bf16.xpose.msra.mxu0 0
    %438 = vmatprep.subr.bf16.mxu0 0
    %439 = vmatpush1.bf16.xpose.msra.mxu0 0
    %440 = vmatprep.subr.bf16.mxu0 0
    %441 = vmatpush1.bf16.xpose.msra.mxu0 0
    %442 = vmatprep.subr.bf16.mxu0 0
    %443 = vmatpush1.bf16.xpose.msra.mxu0 0
    %444 = vmatprep.mubr.bf16.mxu0 %v409
    %445 = vmatmul.mubr.bf16.gmra.mrb[0].mxu0 %v402
    %v446 = vpop.f32.mrb[0].mxu0
    %v447 = vadd.f32 %v386, %v446
    %v448 = vpop.f32.mrb[0].mxu0
    %v449 = vpop.f32.mrb[0].mxu0
    %v450 = vpop.f32.mrb[0].mxu0
    %451 = vdwg.mxu0
    %vm452 = vcmask 57344
    %453 = vst.msk [vmem:[#allocation6] sm:$0x1] %vm452, %v447
    // Predicated region
    $region34: #{_forward_padded.1} parent=1 // pred_check
      _
    $region35: #{_forward_padded.1} parent=1 // pred_check_branch
      %455 = sbr.rel (0) target = $region37
    $region36: #{_forward_padded.1} parent=1 // pred_region
      %s457 = ssub.s32 16, 16
      %458 = vsyncadd [#allocation5], %s457
      %s460 = sshll.u32 [#allocation6], 4
      %s461 = int_to_ptr.vmem [resolvable:$true] %s460
      %463 = dma.vmem_to_hbm [thread:$0]  %s461, 16, %s7, [#allocation5]
    $region37: #{_forward_padded.1} parent=1 // pred_fallthru
      _
    // Predicated region
    $region38: #{_forward_padded.1} parent=1 // pred_check
      _
    $region39: #{_forward_padded.1} parent=1 // pred_check_branch
      %465 = sbr.rel (0) target = $region41
    $region40: #{_forward_padded.1} parent=1 // pred_region
      %466 = dma.done [#allocation5], 16
    $region41: #{_forward_padded.1} parent=1 // pred_fallthru
      _
    %467 = vsyncpa [#allocation4], 1
    %468 = vsyncpa [#allocation5], 1

</llo_original>
